<compile_context>
chip_gen: v5e
topology: v5e:2x2
jax: 0.10.0
libtpu: 0.0.40
codegen_flags: <defaults>
</compile_context>

<pallas_src>
import functools

import jax
import jax.numpy as jnp
from jax.experimental import pallas as pl
from jax.experimental.pallas import tpu as pltpu


def _round_up(x: int, m: int) -> int:
    return ((x + m - 1) // m) * m


def _cdiv(a: int, b: int) -> int:
    return (a + b - 1) // b


def _lex_grouping_kernel(x_ref, o_ref, *scratch, input_size, group_size,
                         block_k, block_o, nk, mask_tail, acc_in_out):
    j = pl.program_id(1)
    k = pl.program_id(2)
    acc_ref = o_ref if acc_in_out else scratch[0]

    @pl.when(k == 0)
    def _init():
        acc_ref[...] = jnp.zeros_like(acc_ref)

    if mask_tail:
        # Only the last K tile can contain OOB garbage lanes; zero them in
        # place (the input block is a private VMEM copy for this step).
        valid = input_size - (nk - 1) * block_k        # static python int
        @pl.when(k == nk - 1)
        def _zero_oob_lanes():
            xv = x_ref[...]
            lane = jax.lax.broadcasted_iota(jnp.int32, xv.shape, 1)
            x_ref[...] = jnp.where(lane < valid, xv, jnp.zeros_like(xv))

    x = x_ref[...]                                     # (tb, tk), native dtype

    # Build the {0,1} grouping tile (tk, to) in-kernel: output column c owns
    # input rows [c*group_size, (c+1)*group_size).  Rows >= input_size are
    # already zeroed in x, so padded rows/columns contribute nothing.
    row = k * block_k + jax.lax.broadcasted_iota(jnp.int32, (block_k, block_o), 0)
    lo = (j * block_o
          + jax.lax.broadcasted_iota(jnp.int32, (block_k, block_o), 1)) * group_size
    g = ((row >= lo) & (row < lo + group_size)).astype(x.dtype)   # exact {0,1}

    acc_ref[...] += jnp.dot(x, g,
                            preferred_element_type=jnp.float32).astype(acc_ref.dtype)

    if not acc_in_out:
        @pl.when(k == nk - 1)
        def _flush():
            o_ref[...] = acc_ref[...].astype(o_ref.dtype)


def lex_grouping_map(probability_distribution, input_size, output_size):
    """JAX/Pallas equivalent of LexGroupingMapper(input_size, output_size).forward."""
    x = probability_distribution
    squeeze = x.ndim == 1
    if squeeze:
        x = x[None, :]
    assert x.shape[-1] == input_size, "last dim must equal input_size"
    b = x.shape[0]

    pad_size = (output_size - input_size % output_size) % output_size
    group_size = (input_size + pad_size) // output_size

    # ---- output tiling: lane-dense, prefer one full-width tile (x read once)
    o128 = _round_up(output_size, 128)
    if o128 <= 2048:
        to, o_pad = o128, o128
    else:
        to = 512
        o_pad = _round_up(output_size, to)
    no = o_pad // to

    # ---- K tiling (reduction axis, last in the grid) ------------------------
    tk = min(2048, _round_up(input_size, 128))
    nk = _cdiv(input_size, tk)

    # ---- batch tiling --------------------------------------------------------
    if b <= 8:
        tb = b                                         # block == full batch dim
    else:
        tb = min(256, (b // 8) * 8)                    # last block clipped
    nb = _cdiv(b, tb)
    # v7x megacore: make sure at least one "parallel" axis has >= 2 iterations.
    if nb == 1 and no == 1 and b >= 16:
        tb = _round_up(_cdiv(b, 2), 8)
        nb = _cdiv(b, tb)

    acc_in_out = (x.dtype == jnp.float32)              # accumulate straight into o_ref
    scratch = [] if acc_in_out else [pltpu.VMEM((tb, to), jnp.float32)]

    kernel = functools.partial(
        _lex_grouping_kernel,
        input_size=input_size,
        group_size=group_size,
        block_k=tk,
        block_o=to,
        nk=nk,
        mask_tail=(input_size % tk != 0),
        acc_in_out=acc_in_out,
    )

    out = pl.pallas_call(
        kernel,
        out_shape=jax.ShapeDtypeStruct((b, o_pad), x.dtype),
        grid_spec=pltpu.PrefetchScalarGridSpec(
            num_scalar_prefetch=0,
            grid=(nb, no, nk),
            in_specs=[pl.BlockSpec((tb, tk), lambda i, j, k: (i, k))],
            out_specs=pl.BlockSpec((tb, to), lambda i, j, k: (i, j)),
            scratch_shapes=scratch,
        ),
        compiler_params=pltpu.CompilerParams(
            dimension_semantics=("parallel", "parallel", "arbitrary")),
    )(x)

    out = out[:, :output_size]
    if squeeze:
        out = out[0]
    return out


def _reference(x, input_size, output_size):
    pad_size = (output_size - input_size % output_size) % output_size
    squeeze = x.ndim == 1
    if squeeze:
        x = x[None, :]
    if pad_size > 0:
        x = jnp.pad(x, ((0, 0), (0, pad_size)))
    out = x.reshape(x.shape[0], output_size, -1).sum(axis=-1)
    return out[0] if squeeze else out


if __name__ == "__main__":
    key = jax.random.PRNGKey(0)

    # Config 1: input_size not a multiple of output_size -> in-kernel tail mask,
    # f32 path accumulating directly into the output block.
    batch, input_size, output_size = 2, 100, 8
    logits = jax.random.normal(key, (batch, input_size), dtype=jnp.float32)
    prob = jax.nn.softmax(logits, axis=-1)

    out = lex_grouping_map(prob, input_size, output_size)
    jax.block_until_ready(out)
    ref = _reference(prob, input_size, output_size)
    assert out.shape == (batch, output_size)
    assert jnp.allclose(out, ref, atol=1e-5, rtol=1e-5), "mismatch vs reference"

    # 1-D (non-batched) path.
    out1d = lex_grouping_map(prob[0], input_size, output_size)
    jax.block_until_ready(out1d)
    ref1d = _reference(prob[0], input_size, output_size)
    assert out1d.shape == (output_size,)
    assert jnp.allclose(out1d, ref1d, atol=1e-5, rtol=1e-5), "1-D mismatch"

    # Config 2: multiple K tiles (tk=2048, nk=2) -> reduction across the grid
    # axis with a ragged final K tile, still the f32 in-output accumulator.
    batch2, input_size2, output_size2 = 4, 2500, 16
    logits2 = jax.random.normal(jax.random.PRNGKey(1), (batch2, input_size2),
                                dtype=jnp.float32)
    prob2 = jax.nn.softmax(logits2, axis=-1)
    out2 = lex_grouping_map(prob2, input_size2, output_size2)
    jax.block_until_ready(out2)
    ref2 = _reference(prob2, input_size2, output_size2)
    assert out2.shape == (batch2, output_size2)
    assert jnp.allclose(out2, ref2, atol=1e-5, rtol=1e-5), "multi-tile mismatch"

    # Config 3: bf16 inputs with a ragged batch (tb=16, clipped last block) and
    # an odd output_size -> exercises the f32 VMEM scratch accumulator path.
    batch3, input_size3, output_size3 = 20, 300, 7
    logits3 = jax.random.normal(jax.random.PRNGKey(2), (batch3, input_size3),
                                dtype=jnp.float32)
    prob3 = jax.nn.softmax(logits3, axis=-1).astype(jnp.bfloat16)
    out3 = lex_grouping_map(prob3, input_size3, output_size3)
    jax.block_until_ready(out3)
    ref3 = _reference(prob3.astype(jnp.float32), input_size3, output_size3)
    assert out3.shape == (batch3, output_size3)
    assert out3.dtype == jnp.bfloat16
    assert jnp.allclose(out3.astype(jnp.float32), ref3, atol=1e-2, rtol=1e-2), \
        "bf16 mismatch"

    print("KERNEL_OK")
</pallas_src>

<mosaic_0001>
module attributes {stable_mosaic.version = 11 : i64} {
  func.func @_lex_grouping_kernel(%arg0: i32, %arg1: i32, %arg2: i32, %arg3: memref<2x128xf32, #tpu.memory_space<vmem>>, %arg4: memref<2x128xf32, #tpu.memory_space<vmem>>) attributes {dimension_semantics = [#tpu.dimension_semantics<parallel>, #tpu.dimension_semantics<parallel>, #tpu.dimension_semantics<arbitrary>], iteration_bounds = array<i64: 1, 1, 1>, scalar_prefetch = 0 : i64, scratch_operands = 0 : i64, tpu.core_type = #tpu.core_type<tc>, window_params = [{transform_indices = @transform_0, window_bounds = array<i64: 2, 128>}, {transform_indices = @transform_1, window_bounds = array<i64: 2, 128>}]} {
    %c0_i32 = arith.constant 0 : i32
    %0 = arith.cmpi eq, %arg2, %c0_i32 : i32
    %1 = arith.extui %0 : i1 to i32
    %c0_i32_0 = arith.constant 0 : i32
    %2 = arith.cmpi ne, %1, %c0_i32_0 : i32
    scf.if %2 {
      %cst_10 = arith.constant 0.000000e+00 : f32
      %28 = vector.broadcast %cst_10 : f32 to vector<2x128xf32>
      %c0_11 = arith.constant 0 : index
      %c0_12 = arith.constant 0 : index
      %29 = vector.load %arg4[%c0_11, %c0_12] : memref<2x128xf32, #tpu.memory_space<vmem>>, vector<2x128xf32>
      tpu.vector_store %arg4[%c0_11, %c0_12], %28 {strides = array<i32>} : memref<2x128xf32, #tpu.memory_space<vmem>>, vector<2x128xf32>,
    } else {
    }
    %c0_i32_1 = arith.constant 0 : i32
    %3 = arith.cmpi eq, %arg2, %c0_i32_1 : i32
    %4 = arith.extui %3 : i1 to i32
    %c0_i32_2 = arith.constant 0 : i32
    %5 = arith.cmpi ne, %4, %c0_i32_2 : i32
    scf.if %5 {
      %c0_10 = arith.constant 0 : index
      %c0_11 = arith.constant 0 : index
      %28 = vector.load %arg3[%c0_10, %c0_11] : memref<2x128xf32, #tpu.memory_space<vmem>>, vector<2x128xf32>
      %29 = tpu.iota {dimensions = array<i32: 1>} : vector<2x128xi32>
      %c100_i32 = arith.constant 100 : i32
      %30 = vector.broadcast %c100_i32 : i32 to vector<2x128xi32>
      %31 = arith.cmpi slt, %29, %30 : vector<2x128xi32>
      %cst_12 = arith.constant 0.000000e+00 : f32
      %32 = vector.broadcast %cst_12 : f32 to vector<2x128xf32>
      %33 = arith.select %31, %28, %32 : vector<2x128xi1>, vector<2x128xf32>
      %c0_13 = arith.constant 0 : index
      %c0_14 = arith.constant 0 : index
      %34 = vector.load %arg3[%c0_13, %c0_14] : memref<2x128xf32, #tpu.memory_space<vmem>>, vector<2x128xf32>
      tpu.vector_store %arg3[%c0_13, %c0_14], %33 {strides = array<i32>} : memref<2x128xf32, #tpu.memory_space<vmem>>, vector<2x128xf32>,
    } else {
    }
    %c0 = arith.constant 0 : index
    %c0_3 = arith.constant 0 : index
    %6 = vector.load %arg3[%c0, %c0_3] : memref<2x128xf32, #tpu.memory_space<vmem>>, vector<2x128xf32>
    %c128_i32 = arith.constant 128 : i32
    %7 = arith.muli %arg2, %c128_i32 : i32
    %8 = tpu.iota {dimensions = array<i32: 0>} : vector<128x128xi32>
    %9 = vector.broadcast %7 : i32 to vector<128x128xi32>
    %10 = arith.addi %9, %8 : vector<128x128xi32>
    %c128_i32_4 = arith.constant 128 : i32
    %11 = arith.muli %arg1, %c128_i32_4 : i32
    %12 = tpu.iota {dimensions = array<i32: 1>} : vector<128x128xi32>
    %13 = vector.broadcast %11 : i32 to vector<128x128xi32>
    %14 = arith.addi %13, %12 : vector<128x128xi32>
    %c13_i32 = arith.constant 13 : i32
    %15 = vector.broadcast %c13_i32 : i32 to vector<128x128xi32>
    %16 = arith.muli %14, %15 : vector<128x128xi32>
    %17 = arith.cmpi sge, %10, %16 : vector<128x128xi32>
    %c13_i32_5 = arith.constant 13 : i32
    %18 = vector.broadcast %c13_i32_5 : i32 to vector<128x128xi32>
    %19 = arith.addi %16, %18 : vector<128x128xi32>
    %20 = arith.cmpi slt, %10, %19 : vector<128x128xi32>
    %21 = arith.andi %17, %20 : vector<128x128xi1>
    %22 = arith.extui %21 : vector<128x128xi1> to vector<128x128xi32>
    %23 = arith.sitofp %22 : vector<128x128xi32> to vector<128x128xf32>
    %c0_6 = arith.constant 0 : index
    %c0_7 = arith.constant 0 : index
    %24 = vector.load %arg4[%c0_6, %c0_7] : memref<2x128xf32, #tpu.memory_space<vmem>>, vector<2x128xf32>
    %cst = arith.constant dense<0.000000e+00> : vector<2x128xf32>
    %25 = tpu.matmul %6, %23, %cst {dimension_numbers = #tpu.dot_dimension_numbers<[1], [0], [0], [1], [0, 0, 1, 1], [], []>} : vector<2x128xf32>, vector<128x128xf32>, vector<2x128xf32> -> vector<2x128xf32>
    %26 = arith.addf %24, %25 : vector<2x128xf32>
    %c0_8 = arith.constant 0 : index
    %c0_9 = arith.constant 0 : index
    %27 = vector.load %arg4[%c0_8, %c0_9] : memref<2x128xf32, #tpu.memory_space<vmem>>, vector<2x128xf32>
    tpu.vector_store %arg4[%c0_8, %c0_9], %26 {strides = array<i32>} : memref<2x128xf32, #tpu.memory_space<vmem>>, vector<2x128xf32>,
    return
  }
  func.func @transform_0(%arg0: i32, %arg1: i32, %arg2: i32) -> (i32, i32) {
    %c0_i32 = arith.constant 0 : i32
    return %arg0, %arg2 : i32, i32
  }
  func.func @transform_1(%arg0: i32, %arg1: i32, %arg2: i32) -> (i32, i32) {
    %c0_i32 = arith.constant 0 : i32
    return %arg0, %arg1 : i32, i32
  }
}

</mosaic_0001>

<llo_original>
// kernel: tpu_custom_call.1
$region0: #{tpu_custom_call.1}
  #allocation0 [shape = 'u32[]', space=smem, size = 0x4, offset = 0x4, fixed_abs, tag = 'smem constant byte address 0x4 - core index']
  #allocation1 [shape = 'u32[72,128]{1,0:T(1,128)}', space=vmem, size = 0x9000, scoped, tag = 'internal scratch']
  %s0 = inlined_call_operand.hbm [shape: f32[2,100], index: 0, kind: input, shape index: {}]
  %s1 = inlined_call_operand.hbm [shape: f32[2,128], index: 1, kind: output, shape index: {}]
  %s2 = sld [smem:[#allocation0]]
  $region22: #{tpu_custom_call.1} parent=0
    _
  %s4 = ssub.s32 1, %s2
  %s5 = scalar_select 0, %s4, %s2
  $region1: #{tpu_custom_call.1} parent=0
    #allocation2 [shape = 'u8[1024]{0}', space=vmem, size = 0x400, scoped, tag = 'input window, operand 0, single buffered']
    #allocation3 [shape = 's32[1]{0}', space=sflag, size = 0x4, scoped, tag = 'scoped memory for tpu_custom_call.1']
    #allocation4 [shape = 's32[1]{0}', space=sflag, size = 0x4, scoped, tag = 'scoped memory for tpu_custom_call.1']
    #allocation5 [shape = 'u8[1024]{0}', space=vmem, size = 0x400, scoped, tag = 'output window, operand 0, single buffered']
    %6 = vsyncpa [#allocation3], 0
    %7 = vsyncpa [#allocation4], 0
    // Predicated region
    $region2: #{tpu_custom_call.1} parent=1 // pred_check
      _
    $region3: #{tpu_custom_call.1} parent=1 // pred_check_branch
      %9 = sbr.rel (0) target = $region5
    $region4: #{tpu_custom_call.1} parent=1 // pred_region
      %11 = vsyncadd [#allocation3], 0
      %s13 = sshll.u32 %s0, 4
      %s14 = int_to_ptr.hbm [resolvable:$true] %s13
      %s15 = sshll.u32 [#allocation2], 4
      %s16 = int_to_ptr.vmem [resolvable:$true] %s15
      %18 = dma.hbm_to_vmem [thread:$0]  %s14, 32, %s16, [#allocation3]
    $region5: #{tpu_custom_call.1} parent=1 // pred_fallthru
      _
    // Predicated region
    $region6: #{tpu_custom_call.1} parent=1 // pred_check
      _
    $region7: #{tpu_custom_call.1} parent=1 // pred_check_branch
      %20 = sbr.rel (0) target = $region9
    $region8: #{tpu_custom_call.1} parent=1 // pred_region
      %22 = dma.done [#allocation3], 32
    $region9: #{tpu_custom_call.1} parent=1 // pred_fallthru
      _
    %p23 = scmp.eq.s32.totalorder 0, 0
    // Predicated region
    $region10: #{tpu_custom_call.1} parent=1 // pred_check
      %p24 = pneg %p23
    $region11: #{tpu_custom_call.1} parent=1 // pred_check_branch
      %26 = sbr.rel (%p24) target = $region13
    $region12: #{tpu_custom_call.1} parent=1 // pred_region
      %27 = vst [vmem:[#allocation5] sm:$0x3] 0.0
      %v28 = vld [vmem:[#allocation2] sm:$0x3]
      %v29 = vlaneseq
      %v30 = vand.u32 %v29, 127
      %vm31 = vcmp.lt.s32.totalorder %v30, 100
      %v32 = vsel %vm31, %v28, 0.0
      %33 = vst [vmem:[#allocation2] sm:$0x3] %v32
    $region13: #{tpu_custom_call.1} parent=1 // pred_fallthru
      _
    %v34 = vld [vmem:[#allocation2] sm:$0x3]
    %s35 = smul.u32 0, 128
    %v36 = vlaneseq
    %v37 = vshrl.u32 %v36, 7
    %v38 = vadd.s32 %v37, 8
    %v39 = vadd.s32 %v37, 16
    %v40 = vadd.s32 %v37, 24
    %v41 = vadd.s32 %v37, 32
    %v42 = vadd.s32 %v37, 40
    %v43 = vadd.s32 %v37, 48
    %v44 = vadd.s32 %v37, 56
    %v45 = vadd.s32 %v37, 64
    %v46 = vadd.s32 %v37, 72
    %v47 = vadd.s32 %v37, 80
    %v48 = vadd.s32 %v37, 88
    %v49 = vadd.s32 %v37, 96
    %v50 = vadd.s32 %v37, 104
    %v51 = vadd.s32 %v37, 112
    %v52 = vadd.s32 %v37, 120
    %v53 = vstv %s35
    %v54 = vadd.s32 %v53, %v37
    %v55 = vadd.s32 %v53, %v38
    %v56 = vadd.s32 %v53, %v39
    %v57 = vadd.s32 %v53, %v40
    %v58 = vadd.s32 %v53, %v41
    %v59 = vadd.s32 %v53, %v42
    %v60 = vadd.s32 %v53, %v43
    %v61 = vadd.s32 %v53, %v44
    %v62 = vadd.s32 %v53, %v45
    %v63 = vadd.s32 %v53, %v46
    %v64 = vadd.s32 %v53, %v47
    %v65 = vadd.s32 %v53, %v48
    %v66 = vadd.s32 %v53, %v49
    %v67 = vadd.s32 %v53, %v50
    %v68 = vadd.s32 %v53, %v51
    %v69 = vadd.s32 %v53, %v52
    %s70 = smul.u32 0, 128
    %v71 = vlaneseq
    %v72 = vand.u32 %v71, 127
    %v73 = vstv %s70
    %v74 = vadd.s32 %v73, %v72
    %v75 = vmul.u32 %v74, 13
    %vm76 = vcmp.ge.s32.totalorder %v54, %v75
    %vm77 = vcmp.ge.s32.totalorder %v55, %v75
    %vm78 = vcmp.ge.s32.totalorder %v56, %v75
    %vm79 = vcmp.ge.s32.totalorder %v57, %v75
    %vm80 = vcmp.ge.s32.totalorder %v58, %v75
    %vm81 = vcmp.ge.s32.totalorder %v59, %v75
    %vm82 = vcmp.ge.s32.totalorder %v60, %v75
    %vm83 = vcmp.ge.s32.totalorder %v61, %v75
    %vm84 = vcmp.ge.s32.totalorder %v62, %v75
    %vm85 = vcmp.ge.s32.totalorder %v63, %v75
    %vm86 = vcmp.ge.s32.totalorder %v64, %v75
    %vm87 = vcmp.ge.s32.totalorder %v65, %v75
    %vm88 = vcmp.ge.s32.totalorder %v66, %v75
    %vm89 = vcmp.ge.s32.totalorder %v67, %v75
    %vm90 = vcmp.ge.s32.totalorder %v68, %v75
    %vm91 = vcmp.ge.s32.totalorder %v69, %v75
    %v92 = vadd.s32 %v75, 13
    %vm93 = vcmp.lt.s32.totalorder %v54, %v92
    %vm94 = vcmp.lt.s32.totalorder %v55, %v92
    %vm95 = vcmp.lt.s32.totalorder %v56, %v92
    %vm96 = vcmp.lt.s32.totalorder %v57, %v92
    %vm97 = vcmp.lt.s32.totalorder %v58, %v92
    %vm98 = vcmp.lt.s32.totalorder %v59, %v92
    %vm99 = vcmp.lt.s32.totalorder %v60, %v92
    %vm100 = vcmp.lt.s32.totalorder %v61, %v92
    %vm101 = vcmp.lt.s32.totalorder %v62, %v92
    %vm102 = vcmp.lt.s32.totalorder %v63, %v92
    %vm103 = vcmp.lt.s32.totalorder %v64, %v92
    %vm104 = vcmp.lt.s32.totalorder %v65, %v92
    %vm105 = vcmp.lt.s32.totalorder %v66, %v92
    %vm106 = vcmp.lt.s32.totalorder %v67, %v92
    %vm107 = vcmp.lt.s32.totalorder %v68, %v92
    %vm108 = vcmp.lt.s32.totalorder %v69, %v92
    %vm109 = vmand %vm76, %vm93
    %vm110 = vmand %vm77, %vm94
    %vm111 = vmand %vm78, %vm95
    %vm112 = vmand %vm79, %vm96
    %vm113 = vmand %vm80, %vm97
    %vm114 = vmand %vm81, %vm98
    %vm115 = vmand %vm82, %vm99
    %vm116 = vmand %vm83, %vm100
    %vm117 = vmand %vm84, %vm101
    %vm118 = vmand %vm85, %vm102
    %vm119 = vmand %vm86, %vm103
    %vm120 = vmand %vm87, %vm104
    %vm121 = vmand %vm88, %vm105
    %vm122 = vmand %vm89, %vm106
    %vm123 = vmand %vm90, %vm107
    %vm124 = vmand %vm91, %vm108
    %v125 = vsel %vm109, 1, 0
    %v126 = vsel %vm110, 1, 0
    %v127 = vsel %vm111, 1, 0
    %v128 = vsel %vm112, 1, 0
    %v129 = vsel %vm113, 1, 0
    %v130 = vsel %vm114, 1, 0
    %v131 = vsel %vm115, 1, 0
    %v132 = vsel %vm116, 1, 0
    %v133 = vsel %vm117, 1, 0
    %v134 = vsel %vm118, 1, 0
    %v135 = vsel %vm119, 1, 0
    %v136 = vsel %vm120, 1, 0
    %v137 = vsel %vm121, 1, 0
    %v138 = vsel %vm122, 1, 0
    %v139 = vsel %vm123, 1, 0
    %v140 = vsel %vm124, 1, 0
    %v141 = vcvt.s32.f32 %v125
    %v142 = vcvt.s32.f32 %v126
    %v143 = vcvt.s32.f32 %v127
    %v144 = vcvt.s32.f32 %v128
    %v145 = vcvt.s32.f32 %v129
    %v146 = vcvt.s32.f32 %v130
    %v147 = vcvt.s32.f32 %v131
    %v148 = vcvt.s32.f32 %v132
    %v149 = vcvt.s32.f32 %v133
    %v150 = vcvt.s32.f32 %v134
    %v151 = vcvt.s32.f32 %v135
    %v152 = vcvt.s32.f32 %v136
    %v153 = vcvt.s32.f32 %v137
    %v154 = vcvt.s32.f32 %v138
    %v155 = vcvt.s32.f32 %v139
    %v156 = vcvt.s32.f32 %v140
    %v157 = vld [vmem:[#allocation5] sm:$0x3]
    %158 = vmatpush.msra.mxu0 %v156
    %159 = vmatpush.msra.mxu0 %v155
    %160 = vmatpush.msra.mxu0 %v154
    %161 = vmatpush.msra.mxu0 %v153
    %162 = vmatpush.msra.mxu0 %v152
    %163 = vmatpush.msra.mxu0 %v151
    %164 = vmatpush.msra.mxu0 %v150
    %165 = vmatpush.msra.mxu0 %v149
    %166 = vmatpush.msra.mxu0 %v148
    %167 = vmatpush.msra.mxu0 %v147
    %168 = vmatpush.msra.mxu0 %v146
    %169 = vmatpush.msra.mxu0 %v145
    %170 = vmatpush.msra.mxu0 %v144
    %171 = vmatpush.msra.mxu0 %v143
    %172 = vmatpush.msra.mxu0 %v142
    %173 = vmatpush.msra.mxu0 %v141
    %174 = vmatmul.f32.gmra.mxu0 %v34
    %v175 = vpop.f32.mrf.mxu0
    %v176 = vadd.f32 0.0, %v175
    %177 = vdwg.mxu0
    %v178 = vadd.f32 %v157, %v176
    %179 = vst [vmem:[#allocation5] sm:$0x3] %v178
    // Predicated region
    $region14: #{tpu_custom_call.1} parent=1 // pred_check
      _
    $region15: #{tpu_custom_call.1} parent=1 // pred_check_branch
      %181 = sbr.rel (0) target = $region17
    $region16: #{tpu_custom_call.1} parent=1 // pred_region
      %183 = vsyncadd [#allocation4], 0
      %s185 = sshll.u32 [#allocation5], 4
      %s186 = int_to_ptr.vmem [resolvable:$true] %s185
      %s187 = sshll.u32 %s1, 4
      %s188 = int_to_ptr.hbm [resolvable:$true] %s187
      %190 = dma.vmem_to_hbm [thread:$0]  %s186, 32, %s188, [#allocation4]
    $region17: #{tpu_custom_call.1} parent=1 // pred_fallthru
      _
    // Predicated region
    $region18: #{tpu_custom_call.1} parent=1 // pred_check
      _
    $region19: #{tpu_custom_call.1} parent=1 // pred_check_branch
      %192 = sbr.rel (0) target = $region21
    $region20: #{tpu_custom_call.1} parent=1 // pred_region
      %194 = dma.done [#allocation4], 32
    $region21: #{tpu_custom_call.1} parent=1 // pred_fallthru
      _
    %195 = vsyncpa [#allocation3], 1
    %196 = vsyncpa [#allocation4], 1

</llo_original>
